<compile_context>
chip_gen: v6e
topology: v6e:2x2x1
jax: 0.10.0
libtpu: 0.0.40
codegen_flags: <defaults>
</compile_context>

<pallas_src>
import functools

import jax
import jax.numpy as jnp
from jax.experimental import pallas as pl
from jax.experimental.pallas import tpu as pltpu


_LANE = 128  # vreg lane width


def _round_up(x, m):
    return ((x + m - 1) // m) * m


def _cdiv(a, b):
    return -(-a // b)


# ----------------------------------------------------------------------------
# Kernels
# ----------------------------------------------------------------------------
def _linear_full_k_kernel(sid_ref, x_ref, w_ref, b_ref, o_ref):
    """Single full-K block: y_tile = x_tile @ W + b. Weight resident in VMEM."""
    del sid_ref  # consumed by the index_maps (scalar prefetch) only
    o_ref[...] = (jnp.dot(x_ref[...], w_ref[...],
                          preferred_element_type=jnp.float32)
                  + jnp.broadcast_to(b_ref[...], o_ref.shape)
                  ).astype(o_ref.dtype)


def _linear_tiled_k_kernel(sid_ref, x_ref, w_ref, b_ref, o_ref, *,
                           k_valid, tk, w_resident):
    """K-tiled path: accumulate directly into the resident f32 output block."""
    del sid_ref
    k = pl.program_id(1)
    nk = pl.num_programs(1)

    @pl.when(k == 0)
    def _():
        # Bias folded into the accumulator init; o_ref (f32) is resident across
        # the K axis (its block index is independent of k) -> no VMEM scratch
        # and no epilogue acc->o copy.
        o_ref[...] = jnp.broadcast_to(b_ref[...], o_ref.shape)

    if w_resident:
        # Whole padded weight lives in VMEM (constant block index, DMA'd once);
        # slice the current K chunk in-kernel.
        k_start = pl.multiple_of(k * tk, tk)
        w_tile = w_ref[pl.ds(k_start, tk), :]
    else:
        w_tile = w_ref[...]

    if (k_valid % tk) != 0:
        last = nk - 1

        @pl.when(k != last)
        def _():
            o_ref[...] += jnp.dot(x_ref[...], w_tile,
                                  preferred_element_type=jnp.float32)

        @pl.when(k == last)
        def _():
            # Only the last K tile can contain out-of-range (garbage) columns;
            # zero them so NaN/Inf garbage can't leak through the zero-padded
            # weight rows.  Gated to the last tile only (no per-step VPU cost).
            x_tile = x_ref[...]
            col = jax.lax.broadcasted_iota(jnp.int32, x_tile.shape, 1)
            x_tile = jnp.where(col < (k_valid - k * tk), x_tile,
                               jnp.zeros_like(x_tile))
            o_ref[...] += jnp.dot(x_tile, w_tile,
                                  preferred_element_type=jnp.float32)
    else:
        o_ref[...] += jnp.dot(x_ref[...], w_tile,
                              preferred_element_type=jnp.float32)


# ----------------------------------------------------------------------------
# Planning (static, Python ints only) and parameter padding
# ----------------------------------------------------------------------------
def _tm_candidates(B):
    if B <= 1024:
        yield B                      # full-dim block is always layout-legal
    for c in (1024, 768, 512, 384, 256, 128, 64, 32, 16, 8):
        if c < B or (c <= B and c != B):
            if c <= B and c != B:
                yield c


def plan_linear(B, K, N, x_dtype, w_dtype):
    """Derive tiling from a VMEM budget instead of fixed thresholds."""
    n_pad = max(_LANE, _round_up(N, _LANE))
    x_b = jnp.dtype(x_dtype).itemsize
    w_b = jnp.dtype(w_dtype).itemsize

    try:
        vmem_cap = int(pltpu.get_tpu_info().vmem_capacity_bytes)
    except Exception:
        vmem_cap = 64 << 20          # v7x floor: plan conservatively if unknown
    budget = int(vmem_cap * 0.70)    # planning budget (headroom for Mosaic scratch)
    vmem_limit = int(vmem_cap * 0.85)

    bias_b = 2 * n_pad * 4
    plan = None

    # --- Case A: weight resident, single full-K block, grid over M only ------
    for tm in _tm_candidates(B):
        need = (2 * K * n_pad * w_b          # weight (counted double-buffered)
                + 2 * tm * K * x_b           # x tile, double-buffered
                + 2 * tm * n_pad * 4         # f32 output tile, double-buffered
                + bias_b)
        if need <= budget and tm >= min(B, 128):
            plan = dict(mode="full_k", tm=tm, tk=K, nk=1, k_pad=K,
                        w_resident=True)
            break

    # --- Case B: K tiled (very large dim_l) -----------------------------------
    if plan is None:
        for tm in _tm_candidates(B):
            for tk in (2048, 1024):
                nk = _cdiv(K, tk)
                k_pad = nk * tk
                w_res = 2 * k_pad * n_pad * w_b
                w_resident = w_res <= budget // 2
                w_cost = w_res if w_resident else 2 * tk * n_pad * w_b
                need = w_cost + 2 * tm * tk * x_b + 2 * tm * n_pad * 4 + bias_b
                if need <= budget:
                    plan = dict(mode="tiled_k", tm=tm, tk=tk, nk=nk,
                                k_pad=k_pad, w_resident=w_resident)
                    break
            if plan is not None:
                break

    if plan is None:
        # Enormous dim_l * num_classes would also need class-dim tiling.
        # TODO(synk): tile the class (N) dimension for very large num_classes.
        nk = _cdiv(K, 1024)
        plan = dict(mode="tiled_k", tm=min(B, 8), tk=1024, nk=nk,
                    k_pad=nk * 1024, w_resident=False)

    # Prefer an even number of M tiles so v7x's two TensorCores split the
    # "parallel" M axis evenly (measured no-op on single-core v5e/v6e).
    tm = plan["tm"]
    nm = _cdiv(B, tm)
    if nm > 1 and nm % 2 == 1:
        tm2 = _round_up(_cdiv(B, nm + 1), 8)
        if 0 < tm2 < tm and _cdiv(B, tm2) % 2 == 0:
            tm = tm2
            nm = _cdiv(B, tm)
    plan.update(tm=tm, nm=nm, n_pad=n_pad, N=N, K=K, vmem_limit=vmem_limit)
    return plan


def pad_linear_params(w, b, plan):
    """Zero-pad (K, N) weight / (N,) bias to the plan's (k_pad, n_pad).

    Call once per parameter set (or keep the whole forward under one jit so XLA
    hoists the padding) so the padded weight stays resident in HBM across calls.
    """
    K, N = plan["K"], plan["N"]
    k_pad, n_pad = plan["k_pad"], plan["n_pad"]
    w_p = w
    if (k_pad, n_pad) != (K, N):
        w_p = jnp.zeros((k_pad, n_pad), w.dtype).at[:K, :N].set(w)
    b_p = jnp.zeros((1, n_pad), jnp.float32).at[0, :N].set(b.astype(jnp.float32))
    return w_p, b_p


# ----------------------------------------------------------------------------
# pallas_call wrapper: y = x_stacked[source_id] @ W + b
# ----------------------------------------------------------------------------
def pallas_linear_from_stack(x_stacked, w_p, b_p, source_id, plan):
    S, B, K = x_stacked.shape
    tm, nm, n_pad = plan["tm"], plan["nm"], plan["n_pad"]
    sid = jnp.asarray(source_id, dtype=jnp.int32).reshape((1,))

    if plan["mode"] == "full_k":
        grid = (nm,)
        in_specs = [
            # Scalar-prefetched source id selects which source's rows to DMA;
            # no wrapper-side copy of the activations.
            pl.BlockSpec((None, tm, K), lambda i, sid_ref: (sid_ref[0], i, 0)),
            # Constant block index across the whole grid -> weight is DMA'd
            # once and stays resident in VMEM for every M tile.
            pl.BlockSpec((K, n_pad), lambda i, sid_ref: (0, 0)),
            pl.BlockSpec((1, n_pad), lambda i, sid_ref: (0, 0)),
        ]
        out_spec = pl.BlockSpec((tm, n_pad), lambda i, sid_ref: (i, 0))
        kernel = _linear_full_k_kernel
        dims = ("parallel",)
    else:
        tk, nk, k_pad = plan["tk"], plan["nk"], plan["k_pad"]
        w_resident = plan["w_resident"]
        grid = (nm, nk)
        if w_resident:
            # Full padded weight resident (constant index -> fetched once);
            # sliced per K step inside the kernel.
            w_spec = pl.BlockSpec((k_pad, n_pad), lambda i, k, sid_ref: (0, 0))
        else:
            # Only when the padded weight exceeds ~half the VMEM budget:
            # streamed (tk, n_pad) tiles (re-streamed once per M tile).
            w_spec = pl.BlockSpec((tk, n_pad), lambda i, k, sid_ref: (k, 0))
        in_specs = [
            pl.BlockSpec((None, tm, tk),
                         lambda i, k, sid_ref: (sid_ref[0], i, k)),
            w_spec,
            pl.BlockSpec((1, n_pad), lambda i, k, sid_ref: (0, 0)),
        ]
        out_spec = pl.BlockSpec((tm, n_pad), lambda i, k, sid_ref: (i, 0))
        kernel = functools.partial(_linear_tiled_k_kernel, k_valid=K, tk=tk,
                                   w_resident=w_resident)
        dims = ("parallel", "arbitrary")

    out = pl.pallas_call(
        kernel,
        out_shape=jax.ShapeDtypeStruct((B, n_pad), jnp.float32),
        grid_spec=pltpu.PrefetchScalarGridSpec(
            num_scalar_prefetch=1,
            grid=grid,
            in_specs=in_specs,
            out_specs=out_spec,
        ),
        compiler_params=pltpu.CompilerParams(
            dimension_semantics=dims,
            vmem_limit_bytes=plan["vmem_limit"],
        ),
    )(sid, x_stacked, w_p, b_p)

    return out[:, :plan["N"]]


# ----------------------------------------------------------------------------
# LinearEvaluator forward (glue in plain JAX, hot path in Pallas).
# ----------------------------------------------------------------------------
def _encoder(x):
    # TODO(synk): encoder is an arbitrary frozen nn.Module in the original
    # module; modeled here as a frozen identity encoder returning a 1-tuple.
    return (x,)


def linear_evaluator_forward(x_sources, w, b, source_id):
    """x_sources: (num_sources, B, C, H, W) stack of per-source inputs."""
    num_sources = x_sources.shape[0]
    sid = source_id if num_sources > 1 else 0

    # Identity encoder applied to the stack; the source select is deferred into
    # the kernel's index_map (scalar prefetch) to avoid an extra HBM pass.
    x = _encoder(x_sources)[0]
    x = jax.lax.stop_gradient(x)          # .detach() (forward no-op)
    if x.ndim == 2:                       # per-source features are 1-D
        x = x[:, None, :]                 # unsqueeze(0) per source
    S, B = x.shape[0], x.shape[1]
    x = x.reshape(S, B, -1)               # Flatten: (S, B, dim_l)
    K = x.shape[-1]
    N = b.shape[0]

    plan = plan_linear(B, K, N, x.dtype, w.dtype)
    w_p, b_p = pad_linear_params(w, b, plan)   # hoisted/constant-folded under jit

    y = pallas_linear_from_stack(x, w_p, b_p, sid, plan)   # nn.Linear
    # ModelOutput(z={source_id: y}, attrs={})
    return {"z": {source_id: y}, "attrs": {}}


if __name__ == "__main__":
    # Small shapes: 2 sources, batch=2, channels=4, spatial=16x16
    num_sources, B, C, H, W = 2, 2, 4, 16, 16
    dim_l = C * H * W                     # 1024
    num_classes = 10
    source_id = 1

    key = jax.random.PRNGKey(0)
    kx, kw, kb = jax.random.split(key, 3)

    x_sources = jax.random.normal(kx, (num_sources, B, C, H, W), dtype=jnp.float32)

    # nn.Linear(dim_l, num_classes): weight (num_classes, dim_l), bias (num_classes,)
    bound = 1.0 / (dim_l ** 0.5)
    w_pt = jax.random.uniform(kw, (num_classes, dim_l), minval=-bound, maxval=bound,
                              dtype=jnp.float32)
    b_pt = jax.random.uniform(kb, (num_classes,), minval=-bound, maxval=bound,
                              dtype=jnp.float32)
    w = w_pt.T                            # (dim_l, num_classes) so y = x @ W^T + b

    fwd = jax.jit(linear_evaluator_forward, static_argnums=(3,))
    out = fwd(x_sources, w, b_pt, source_id)
    y = jax.block_until_ready(out["z"][source_id])

    # Reference check (plain JAX)
    x_ref = x_sources[source_id].reshape(B, -1)
    y_ref = x_ref @ w + b_pt
    assert y.shape == (B, num_classes)
    assert jnp.allclose(y, y_ref, atol=1e-4, rtol=1e-4)

    print("KERNEL_OK")
</pallas_src>

<mosaic_0001>
module attributes {stable_mosaic.version = 11 : i64} {
  func.func @_linear_full_k_kernel(%arg0: i32, %arg1: memref<1xi32, #tpu.memory_space<smem>>, %arg2: memref<1x2x1024xf32, #tpu.memory_space<vmem>>, %arg3: memref<1024x128xf32, #tpu.memory_space<vmem>>, %arg4: memref<1x128xf32, #tpu.memory_space<vmem>>, %arg5: memref<2x128xf32, #tpu.memory_space<vmem>>) attributes {dimension_semantics = [#tpu.dimension_semantics<parallel>], iteration_bounds = array<i64: 1>, scalar_prefetch = 1 : i64, scratch_operands = 0 : i64, tpu.core_type = #tpu.core_type<tc>, window_params = [{transform_indices = @transform_0, window_bounds = array<i64: 1, 2, 1024>}, {pipeline_mode = #tpu.pipeline_mode<synchronous>, transform_indices = @transform_1, window_bounds = array<i64: 1024, 128>}, {pipeline_mode = #tpu.pipeline_mode<synchronous>, transform_indices = @transform_2, window_bounds = array<i64: 1, 128>}, {transform_indices = @transform_3, window_bounds = array<i64: 2, 128>}]} {
    %c0 = arith.constant 0 : index
    %c0_0 = arith.constant 0 : index
    %c0_1 = arith.constant 0 : index
    %0 = vector.load %arg2[%c0, %c0_0, %c0_1] : memref<1x2x1024xf32, #tpu.memory_space<vmem>>, vector<1x2x1024xf32>
    %1 = vector.shape_cast %0 : vector<1x2x1024xf32> to vector<2x1024xf32>
    %c0_2 = arith.constant 0 : index
    %c0_3 = arith.constant 0 : index
    %2 = vector.load %arg3[%c0_2, %c0_3] : memref<1024x128xf32, #tpu.memory_space<vmem>>, vector<1024x128xf32>
    %cst = arith.constant dense<0.000000e+00> : vector<2x128xf32>
    %3 = tpu.matmul %1, %2, %cst {dimension_numbers = #tpu.dot_dimension_numbers<[1], [0], [0], [1], [0, 0, 1, 1], [], []>} : vector<2x1024xf32>, vector<1024x128xf32>, vector<2x128xf32> -> vector<2x128xf32>
    %c0_4 = arith.constant 0 : index
    %c0_5 = arith.constant 0 : index
    %4 = vector.load %arg4[%c0_4, %c0_5] : memref<1x128xf32, #tpu.memory_space<vmem>>, vector<1x128xf32>
    %5 = vector.shape_cast %4 : vector<1x128xf32> to vector<1x128xf32>
    %6 = vector.broadcast %5 : vector<1x128xf32> to vector<2x128xf32>
    %7 = arith.addf %3, %6 : vector<2x128xf32>
    %c0_6 = arith.constant 0 : index
    %c0_7 = arith.constant 0 : index
    %8 = vector.load %arg5[%c0_6, %c0_7] : memref<2x128xf32, #tpu.memory_space<vmem>>, vector<2x128xf32>
    tpu.vector_store %arg5[%c0_6, %c0_7], %7 {strides = array<i32>} : memref<2x128xf32, #tpu.memory_space<vmem>>, vector<2x128xf32>,
    return
  }
  func.func @transform_0(%arg0: i32, %arg1: memref<1xi32, #tpu.memory_space<smem>>) -> (i32, i32, i32) {
    %c0 = arith.constant 0 : index
    %0 = memref.load %arg1[%c0] : memref<1xi32, #tpu.memory_space<smem>>
    %c0_i32 = arith.constant 0 : i32
    %c0_i32_0 = arith.constant 0 : i32
    return %0, %arg0, %c0_i32 : i32, i32, i32
  }
  func.func @transform_1(%arg0: i32, %arg1: memref<1xi32, #tpu.memory_space<smem>>) -> (i32, i32) {
    %c0_i32 = arith.constant 0 : i32
    %c0_i32_0 = arith.constant 0 : i32
    %c0_i32_1 = arith.constant 0 : i32
    return %c0_i32, %c0_i32_0 : i32, i32
  }
  func.func @transform_2(%arg0: i32, %arg1: memref<1xi32, #tpu.memory_space<smem>>) -> (i32, i32) {
    %c0_i32 = arith.constant 0 : i32
    %c0_i32_0 = arith.constant 0 : i32
    %c0_i32_1 = arith.constant 0 : i32
    return %c0_i32, %c0_i32_0 : i32, i32
  }
  func.func @transform_3(%arg0: i32, %arg1: memref<1xi32, #tpu.memory_space<smem>>) -> (i32, i32) {
    %c0_i32 = arith.constant 0 : i32
    %c0_i32_0 = arith.constant 0 : i32
    return %arg0, %c0_i32 : i32, i32
  }
}

</mosaic_0001>

<llo_original>
// kernel: linear_evaluator_forward.1
$region0: #{linear_evaluator_forward.1}
  #allocation0 [shape = 'u32[]', space=smem, size = 0x4, offset = 0x4, fixed_abs, tag = 'smem constant byte address 0x4 - core index']
  #allocation1 [shape = 'u32[144,128]{1,0:T(1,128)}', space=vmem, size = 0x12000, scoped, tag = 'internal scratch']
  #allocation2 [shape = 's32[1]{0}', space=sflag, size = 0x4, scoped, tag = 'scoped memory for linear_evaluator_forward.1']
  #allocation3 [shape = 's32[1]{0:T(128)S(6)}', space=smem, size = 0x200, scoped, tag = 'prefetched SMEM operand 0']
  %s0 = inlined_call_operand.<no memory space> [shape: s32[1], index: 0, kind: input, shape index: {}]
  %s1 = inlined_call_operand.vmem [shape: f32[2,2,1024], index: 1, kind: input, shape index: {}]
  %s2 = inlined_call_operand.vmem [shape: f32[1024,128], index: 2, kind: input, shape index: {}]
  %s3 = inlined_call_operand.vmem [shape: f32[1,128], index: 3, kind: input, shape index: {}]
  %s4 = inlined_call_operand.hbm [shape: f32[2,128], index: 4, kind: output, shape index: {}]
  %s5 = sld [smem:[#allocation0]]
  $region22: #{linear_evaluator_forward.1} parent=0
    _
  %s7 = ssub.s32 1, %s5
  %s8 = scalar_select 0, %s7, %s5
  %9 = sst [smem:[#allocation3]] %s0
  $region1: #{linear_evaluator_forward.1} parent=0
    #allocation4 [shape = 'u8[1024]{0}', space=vmem, size = 0x400, scoped, tag = 'output window, operand 0, single buffered']
    #allocation5 [shape = 's32[1]{0}', space=sflag, size = 0x4, scoped, tag = 'scoped memory for linear_evaluator_forward.1']
    %10 = vsyncpa [#allocation5], 0
    // Predicated region
    $region2: #{linear_evaluator_forward.1} parent=1 // pred_check
      _
    $region3: #{linear_evaluator_forward.1} parent=1 // pred_check_branch
      %12 = sbr.rel (0) target = $region5
    $region4: #{linear_evaluator_forward.1} parent=1 // pred_region
      %s13 = sld [smem:[#allocation3]]
      %p14 = scmp.lt.s32.totalorder %s13, 1
      %s15 = scalar_select %p14, %s13, 1
      %s16 = smul.addr %s15, 8
      %s17 = smul.addr %s16, 2
      %s18 = scalar_lea.vmem %s1, %s17
      %s19 = sld [smem:[#allocation3]]
    $region5: #{linear_evaluator_forward.1} parent=1 // pred_fallthru
      _
    // Predicated region
    $region6: #{linear_evaluator_forward.1} parent=1 // pred_check
      _
    $region7: #{linear_evaluator_forward.1} parent=1 // pred_check_branch
      %21 = sbr.rel (0) target = $region9
    $region8: #{linear_evaluator_forward.1} parent=1 // pred_region
      _
    $region9: #{linear_evaluator_forward.1} parent=1 // pred_fallthru
      _
    // Predicated region
    $region10: #{linear_evaluator_forward.1} parent=1 // pred_check
      _
    $region11: #{linear_evaluator_forward.1} parent=1 // pred_check_branch
      %23 = sbr.rel (0) target = $region13
    $region12: #{linear_evaluator_forward.1} parent=1 // pred_region
      _
    $region13: #{linear_evaluator_forward.1} parent=1 // pred_fallthru
      _
    %s24 = sld [smem:[#allocation3]]
    %p25 = scmp.lt.s32.totalorder %s24, 1
    %s26 = scalar_select %p25, %s24, 1
    %s27 = smul.addr %s26, 8
    %s28 = smul.addr %s27, 2
    %s29 = scalar_lea.vmem %s1, %s28
    %s30 = sld [smem:[#allocation3]]
    %p31 = scmp.lt.s32.totalorder %s30, 1
    %s32 = scalar_select %p31, %s30, 1
    %s33 = smul.addr %s32, 8
    %s34 = smul.addr %s33, 2
    %s35 = scalar_lea.vmem %s1, %s34
    %s36 = sld [smem:[#allocation3]]
    %v37 = vld [vmem:[%s35] sm:$0xff]
    %v38 = vld [vmem:[%s35 + $0x8] sm:$0xff]
    %v39 = vld [vmem:[%s2] sm:$0xff]
    %v40 = vld [vmem:[%s2 + $0x8] sm:$0xff]
    %v41 = vld [vmem:[%s2 + $0x10] sm:$0xff]
    %v42 = vld [vmem:[%s2 + $0x18] sm:$0xff]
    %v43 = vld [vmem:[%s2 + $0x20] sm:$0xff]
    %v44 = vld [vmem:[%s2 + $0x28] sm:$0xff]
    %v45 = vld [vmem:[%s2 + $0x30] sm:$0xff]
    %v46 = vld [vmem:[%s2 + $0x38] sm:$0xff]
    %v47 = vld [vmem:[%s2 + $0x40] sm:$0xff]
    %v48 = vld [vmem:[%s2 + $0x48] sm:$0xff]
    %v49 = vld [vmem:[%s2 + $0x50] sm:$0xff]
    %v50 = vld [vmem:[%s2 + $0x58] sm:$0xff]
    %v51 = vld [vmem:[%s2 + $0x60] sm:$0xff]
    %v52 = vld [vmem:[%s2 + $0x68] sm:$0xff]
    %v53 = vld [vmem:[%s2 + $0x70] sm:$0xff]
    %v54 = vld [vmem:[%s2 + $0x78] sm:$0xff]
    %v55 = vld [vmem:[%s2 + $0x80] sm:$0xff]
    %v56 = vld [vmem:[%s2 + $0x88] sm:$0xff]
    %v57 = vld [vmem:[%s2 + $0x90] sm:$0xff]
    %v58 = vld [vmem:[%s2 + $0x98] sm:$0xff]
    %v59 = vld [vmem:[%s2 + $0xa0] sm:$0xff]
    %v60 = vld [vmem:[%s2 + $0xa8] sm:$0xff]
    %v61 = vld [vmem:[%s2 + $0xb0] sm:$0xff]
    %v62 = vld [vmem:[%s2 + $0xb8] sm:$0xff]
    %v63 = vld [vmem:[%s2 + $0xc0] sm:$0xff]
    %v64 = vld [vmem:[%s2 + $0xc8] sm:$0xff]
    %v65 = vld [vmem:[%s2 + $0xd0] sm:$0xff]
    %v66 = vld [vmem:[%s2 + $0xd8] sm:$0xff]
    %v67 = vld [vmem:[%s2 + $0xe0] sm:$0xff]
    %v68 = vld [vmem:[%s2 + $0xe8] sm:$0xff]
    %v69 = vld [vmem:[%s2 + $0xf0] sm:$0xff]
    %v70 = vld [vmem:[%s2 + $0xf8] sm:$0xff]
    %v71 = vld [vmem:[%s2 + $0x100] sm:$0xff]
    %v72 = vld [vmem:[%s2 + $0x108] sm:$0xff]
    %v73 = vld [vmem:[%s2 + $0x110] sm:$0xff]
    %v74 = vld [vmem:[%s2 + $0x118] sm:$0xff]
    %v75 = vld [vmem:[%s2 + $0x120] sm:$0xff]
    %v76 = vld [vmem:[%s2 + $0x128] sm:$0xff]
    %v77 = vld [vmem:[%s2 + $0x130] sm:$0xff]
    %v78 = vld [vmem:[%s2 + $0x138] sm:$0xff]
    %v79 = vld [vmem:[%s2 + $0x140] sm:$0xff]
    %v80 = vld [vmem:[%s2 + $0x148] sm:$0xff]
    %v81 = vld [vmem:[%s2 + $0x150] sm:$0xff]
    %v82 = vld [vmem:[%s2 + $0x158] sm:$0xff]
    %v83 = vld [vmem:[%s2 + $0x160] sm:$0xff]
    %v84 = vld [vmem:[%s2 + $0x168] sm:$0xff]
    %v85 = vld [vmem:[%s2 + $0x170] sm:$0xff]
    %v86 = vld [vmem:[%s2 + $0x178] sm:$0xff]
    %v87 = vld [vmem:[%s2 + $0x180] sm:$0xff]
    %v88 = vld [vmem:[%s2 + $0x188] sm:$0xff]
    %v89 = vld [vmem:[%s2 + $0x190] sm:$0xff]
    %v90 = vld [vmem:[%s2 + $0x198] sm:$0xff]
    %v91 = vld [vmem:[%s2 + $0x1a0] sm:$0xff]
    %v92 = vld [vmem:[%s2 + $0x1a8] sm:$0xff]
    %v93 = vld [vmem:[%s2 + $0x1b0] sm:$0xff]
    %v94 = vld [vmem:[%s2 + $0x1b8] sm:$0xff]
    %v95 = vld [vmem:[%s2 + $0x1c0] sm:$0xff]
    %v96 = vld [vmem:[%s2 + $0x1c8] sm:$0xff]
    %v97 = vld [vmem:[%s2 + $0x1d0] sm:$0xff]
    %v98 = vld [vmem:[%s2 + $0x1d8] sm:$0xff]
    %v99 = vld [vmem:[%s2 + $0x1e0] sm:$0xff]
    %v100 = vld [vmem:[%s2 + $0x1e8] sm:$0xff]
    %v101 = vld [vmem:[%s2 + $0x1f0] sm:$0xff]
    %v102 = vld [vmem:[%s2 + $0x1f8] sm:$0xff]
    %v103 = vld [vmem:[%s2 + $0x200] sm:$0xff]
    %v104 = vld [vmem:[%s2 + $0x208] sm:$0xff]
    %v105 = vld [vmem:[%s2 + $0x210] sm:$0xff]
    %v106 = vld [vmem:[%s2 + $0x218] sm:$0xff]
    %v107 = vld [vmem:[%s2 + $0x220] sm:$0xff]
    %v108 = vld [vmem:[%s2 + $0x228] sm:$0xff]
    %v109 = vld [vmem:[%s2 + $0x230] sm:$0xff]
    %v110 = vld [vmem:[%s2 + $0x238] sm:$0xff]
    %v111 = vld [vmem:[%s2 + $0x240] sm:$0xff]
    %v112 = vld [vmem:[%s2 + $0x248] sm:$0xff]
    %v113 = vld [vmem:[%s2 + $0x250] sm:$0xff]
    %v114 = vld [vmem:[%s2 + $0x258] sm:$0xff]
    %v115 = vld [vmem:[%s2 + $0x260] sm:$0xff]
    %v116 = vld [vmem:[%s2 + $0x268] sm:$0xff]
    %v117 = vld [vmem:[%s2 + $0x270] sm:$0xff]
    %v118 = vld [vmem:[%s2 + $0x278] sm:$0xff]
    %v119 = vld [vmem:[%s2 + $0x280] sm:$0xff]
    %v120 = vld [vmem:[%s2 + $0x288] sm:$0xff]
    %v121 = vld [vmem:[%s2 + $0x290] sm:$0xff]
    %v122 = vld [vmem:[%s2 + $0x298] sm:$0xff]
    %v123 = vld [vmem:[%s2 + $0x2a0] sm:$0xff]
    %v124 = vld [vmem:[%s2 + $0x2a8] sm:$0xff]
    %v125 = vld [vmem:[%s2 + $0x2b0] sm:$0xff]
    %v126 = vld [vmem:[%s2 + $0x2b8] sm:$0xff]
    %v127 = vld [vmem:[%s2 + $0x2c0] sm:$0xff]
    %v128 = vld [vmem:[%s2 + $0x2c8] sm:$0xff]
    %v129 = vld [vmem:[%s2 + $0x2d0] sm:$0xff]
    %v130 = vld [vmem:[%s2 + $0x2d8] sm:$0xff]
    %v131 = vld [vmem:[%s2 + $0x2e0] sm:$0xff]
    %v132 = vld [vmem:[%s2 + $0x2e8] sm:$0xff]
    %v133 = vld [vmem:[%s2 + $0x2f0] sm:$0xff]
    %v134 = vld [vmem:[%s2 + $0x2f8] sm:$0xff]
    %v135 = vld [vmem:[%s2 + $0x300] sm:$0xff]
    %v136 = vld [vmem:[%s2 + $0x308] sm:$0xff]
    %v137 = vld [vmem:[%s2 + $0x310] sm:$0xff]
    %v138 = vld [vmem:[%s2 + $0x318] sm:$0xff]
    %v139 = vld [vmem:[%s2 + $0x320] sm:$0xff]
    %v140 = vld [vmem:[%s2 + $0x328] sm:$0xff]
    %v141 = vld [vmem:[%s2 + $0x330] sm:$0xff]
    %v142 = vld [vmem:[%s2 + $0x338] sm:$0xff]
    %v143 = vld [vmem:[%s2 + $0x340] sm:$0xff]
    %v144 = vld [vmem:[%s2 + $0x348] sm:$0xff]
    %v145 = vld [vmem:[%s2 + $0x350] sm:$0xff]
    %v146 = vld [vmem:[%s2 + $0x358] sm:$0xff]
    %v147 = vld [vmem:[%s2 + $0x360] sm:$0xff]
    %v148 = vld [vmem:[%s2 + $0x368] sm:$0xff]
    %v149 = vld [vmem:[%s2 + $0x370] sm:$0xff]
    %v150 = vld [vmem:[%s2 + $0x378] sm:$0xff]
    %v151 = vld [vmem:[%s2 + $0x380] sm:$0xff]
    %v152 = vld [vmem:[%s2 + $0x388] sm:$0xff]
    %v153 = vld [vmem:[%s2 + $0x390] sm:$0xff]
    %v154 = vld [vmem:[%s2 + $0x398] sm:$0xff]
    %v155 = vld [vmem:[%s2 + $0x3a0] sm:$0xff]
    %v156 = vld [vmem:[%s2 + $0x3a8] sm:$0xff]
    %v157 = vld [vmem:[%s2 + $0x3b0] sm:$0xff]
    %v158 = vld [vmem:[%s2 + $0x3b8] sm:$0xff]
    %v159 = vld [vmem:[%s2 + $0x3c0] sm:$0xff]
    %v160 = vld [vmem:[%s2 + $0x3c8] sm:$0xff]
    %v161 = vld [vmem:[%s2 + $0x3d0] sm:$0xff]
    %v162 = vld [vmem:[%s2 + $0x3d8] sm:$0xff]
    %v163 = vld [vmem:[%s2 + $0x3e0] sm:$0xff]
    %v164 = vld [vmem:[%s2 + $0x3e8] sm:$0xff]
    %v165 = vld [vmem:[%s2 + $0x3f0] sm:$0xff]
    %v166 = vld [vmem:[%s2 + $0x3f8] sm:$0xff]
    %v167 = vld [vmem:[%s3] sm:$0x1]
    %v169 = vlaneseq
    %v170 = vshrl.u32 %v169, 7
    %v171 = vsub.s32 0, %v170
    %v172 = vrot.slane %v167, %v171
    %v176 = vcombine.high %v37, %v37
    %v178 = vunpack.c.l.s4 1983009808
    %v179 = vunpack.c.0.s8 %v178
    %v180 = vlaneseq
    %v181 = vshrl.u32 %v180, 7
    %v182 = vsub.s32 %v179, %v181
    %v183 = vrot.slane %v37, %v182
    %v185 = vunpack.c.l.s4 1983009808
    %v186 = vunpack.c.0.s8 %v185
    %v187 = vlaneseq
    %v188 = vshrl.u32 %v187, 7
    %v189 = vsub.s32 %v186, %v188
    %v190 = vrot.slane %v176, %v189
    %v191 = vcombine.high %v183, %v183
    %v192 = vcombine.high %v190, %v190
    %v193 = vcombine.high %v38, %v38
    %v195 = vunpack.c.l.s4 1983009808
    %v196 = vunpack.c.0.s8 %v195
    %v197 = vlaneseq
    %v198 = vshrl.u32 %v197, 7
    %v199 = vsub.s32 %v196, %v198
    %v200 = vrot.slane %v38, %v199
    %v202 = vunpack.c.l.s4 1983009808
    %v203 = vunpack.c.0.s8 %v202
    %v204 = vlaneseq
    %v205 = vshrl.u32 %v204, 7
    %v206 = vsub.s32 %v203, %v205
    %v207 = vrot.slane %v193, %v206
    %v208 = vcombine.high %v200, %v200
    %v209 = vcombine.high %v207, %v207
    %218 = vmatprep.subr.mxu0 0.0
    %219 = vmatpush1.msra.mxu0 %v54
    %220 = vmatprep.subr.mxu0 0.0
    %221 = vmatpush1.msra.mxu0 %v53
    %222 = vmatprep.subr.mxu0 0.0
    %223 = vmatpush1.msra.mxu0 %v52
    %224 = vmatprep.subr.mxu0 0.0
    %225 = vmatpush1.msra.mxu0 %v51
    %226 = vmatprep.subr.mxu0 0.0
    %227 = vmatpush1.msra.mxu0 %v50
    %228 = vmatprep.subr.mxu0 0.0
    %229 = vmatpush1.msra.mxu0 %v49
    %230 = vmatprep.subr.mxu0 0.0
    %231 = vmatpush1.msra.mxu0 %v48
    %232 = vmatprep.subr.mxu0 0.0
    %233 = vmatpush1.msra.mxu0 %v47
    %234 = vmatprep.subr.mxu0 0.0
    %235 = vmatpush1.msra.mxu0 %v46
    %236 = vmatprep.subr.mxu0 0.0
    %237 = vmatpush1.msra.mxu0 %v45
    %238 = vmatprep.subr.mxu0 0.0
    %239 = vmatpush1.msra.mxu0 %v44
    %240 = vmatprep.subr.mxu0 0.0
    %241 = vmatpush1.msra.mxu0 %v43
    %242 = vmatprep.subr.mxu0 0.0
    %243 = vmatpush1.msra.mxu0 %v42
    %244 = vmatprep.subr.mxu0 0.0
    %245 = vmatpush1.msra.mxu0 %v41
    %246 = vmatprep.subr.mxu0 0.0
    %247 = vmatpush1.msra.mxu0 %v40
    %248 = vmatprep.subr.mxu0 0.0
    %249 = vmatpush1.msra.mxu0 %v39
    %250 = vmatprep.subr.mxu0 0.0
    %251 = vmatpush2.msra.mxu0 %v70
    %252 = vmatprep.subr.mxu0 0.0
    %253 = vmatpush2.msra.mxu0 %v69
    %254 = vmatprep.subr.mxu0 0.0
    %255 = vmatpush2.msra.mxu0 %v68
    %256 = vmatprep.subr.mxu0 0.0
    %257 = vmatpush2.msra.mxu0 %v67
    %258 = vmatprep.subr.mxu0 0.0
    %259 = vmatpush2.msra.mxu0 %v66
    %260 = vmatprep.subr.mxu0 0.0
    %261 = vmatpush2.msra.mxu0 %v65
    %262 = vmatprep.subr.mxu0 0.0
    %263 = vmatpush2.msra.mxu0 %v64
    %264 = vmatprep.subr.mxu0 0.0
    %265 = vmatpush2.msra.mxu0 %v63
    %266 = vmatprep.subr.mxu0 0.0
    %267 = vmatpush2.msra.mxu0 %v62
    %268 = vmatprep.subr.mxu0 0.0
    %269 = vmatpush2.msra.mxu0 %v61
    %270 = vmatprep.subr.mxu0 0.0
    %271 = vmatpush2.msra.mxu0 %v60
    %272 = vmatprep.subr.mxu0 0.0
    %273 = vmatpush2.msra.mxu0 %v59
    %274 = vmatprep.subr.mxu0 0.0
    %275 = vmatpush2.msra.mxu0 %v58
    %276 = vmatprep.subr.mxu0 0.0
    %277 = vmatpush2.msra.mxu0 %v57
    %278 = vmatprep.subr.mxu0 0.0
    %279 = vmatpush2.msra.mxu0 %v56
    %280 = vmatprep.subr.mxu0 0.0
    %281 = vmatpush2.msra.mxu0 %v55
    %282 = vmatprep.mubr.f32.mxu0 %v191
    %283 = vmatmul.mubr.f32.gmra.mxu0 %v183
    %v284 = vpop.f32.mrf.mxu0
    %v285 = vadd.f32 %v172, %v284
    %v286 = vpop.f32.mrf.mxu0
    %287 = vdwg.mxu0
    %288 = vmatprep.subr.mxu0 0.0
    %289 = vmatpush1.msra.mxu0 %v86
    %290 = vmatprep.subr.mxu0 0.0
    %291 = vmatpush1.msra.mxu0 %v85
    %292 = vmatprep.subr.mxu0 0.0
    %293 = vmatpush1.msra.mxu0 %v84
    %294 = vmatprep.subr.mxu0 0.0
    %295 = vmatpush1.msra.mxu0 %v83
    %296 = vmatprep.subr.mxu0 0.0
    %297 = vmatpush1.msra.mxu0 %v82
    %298 = vmatprep.subr.mxu0 0.0
    %299 = vmatpush1.msra.mxu0 %v81
    %300 = vmatprep.subr.mxu0 0.0
    %301 = vmatpush1.msra.mxu0 %v80
    %302 = vmatprep.subr.mxu0 0.0
    %303 = vmatpush1.msra.mxu0 %v79
    %304 = vmatprep.subr.mxu0 0.0
    %305 = vmatpush1.msra.mxu0 %v78
    %306 = vmatprep.subr.mxu0 0.0
    %307 = vmatpush1.msra.mxu0 %v77
    %308 = vmatprep.subr.mxu0 0.0
    %309 = vmatpush1.msra.mxu0 %v76
    %310 = vmatprep.subr.mxu0 0.0
    %311 = vmatpush1.msra.mxu0 %v75
    %312 = vmatprep.subr.mxu0 0.0
    %313 = vmatpush1.msra.mxu0 %v74
    %314 = vmatprep.subr.mxu0 0.0
    %315 = vmatpush1.msra.mxu0 %v73
    %316 = vmatprep.subr.mxu0 0.0
    %317 = vmatpush1.msra.mxu0 %v72
    %318 = vmatprep.subr.mxu0 0.0
    %319 = vmatpush1.msra.mxu0 %v71
    %320 = vmatprep.subr.mxu0 0.0
    %321 = vmatpush2.msra.mxu0 %v102
    %322 = vmatprep.subr.mxu0 0.0
    %323 = vmatpush2.msra.mxu0 %v101
    %324 = vmatprep.subr.mxu0 0.0
    %325 = vmatpush2.msra.mxu0 %v100
    %326 = vmatprep.subr.mxu0 0.0
    %327 = vmatpush2.msra.mxu0 %v99
    %328 = vmatprep.subr.mxu0 0.0
    %329 = vmatpush2.msra.mxu0 %v98
    %330 = vmatprep.subr.mxu0 0.0
    %331 = vmatpush2.msra.mxu0 %v97
    %332 = vmatprep.subr.mxu0 0.0
    %333 = vmatpush2.msra.mxu0 %v96
    %334 = vmatprep.subr.mxu0 0.0
    %335 = vmatpush2.msra.mxu0 %v95
    %336 = vmatprep.subr.mxu0 0.0
    %337 = vmatpush2.msra.mxu0 %v94
    %338 = vmatprep.subr.mxu0 0.0
    %339 = vmatpush2.msra.mxu0 %v93
    %340 = vmatprep.subr.mxu0 0.0
    %341 = vmatpush2.msra.mxu0 %v92
    %342 = vmatprep.subr.mxu0 0.0
    %343 = vmatpush2.msra.mxu0 %v91
    %344 = vmatprep.subr.mxu0 0.0
    %345 = vmatpush2.msra.mxu0 %v90
    %346 = vmatprep.subr.mxu0 0.0
    %347 = vmatpush2.msra.mxu0 %v89
    %348 = vmatprep.subr.mxu0 0.0
    %349 = vmatpush2.msra.mxu0 %v88
    %350 = vmatprep.subr.mxu0 0.0
    %351 = vmatpush2.msra.mxu0 %v87
    %352 = vmatprep.mubr.f32.mxu0 %v192
    %353 = vmatmul.mubr.f32.gmra.mxu0 %v190
    %v354 = vpop.f32.mrf.mxu0
    %v355 = vadd.f32 %v285, %v354
    %v356 = vpop.f32.mrf.mxu0
    %357 = vdwg.mxu0
    %358 = vmatprep.subr.mxu0 0.0
    %359 = vmatpush1.msra.mxu0 %v118
    %360 = vmatprep.subr.mxu0 0.0
    %361 = vmatpush1.msra.mxu0 %v117
    %362 = vmatprep.subr.mxu0 0.0
    %363 = vmatpush1.msra.mxu0 %v116
    %364 = vmatprep.subr.mxu0 0.0
    %365 = vmatpush1.msra.mxu0 %v115
    %366 = vmatprep.subr.mxu0 0.0
    %367 = vmatpush1.msra.mxu0 %v114
    %368 = vmatprep.subr.mxu0 0.0
    %369 = vmatpush1.msra.mxu0 %v113
    %370 = vmatprep.subr.mxu0 0.0
    %371 = vmatpush1.msra.mxu0 %v112
    %372 = vmatprep.subr.mxu0 0.0
    %373 = vmatpush1.msra.mxu0 %v111
    %374 = vmatprep.subr.mxu0 0.0
    %375 = vmatpush1.msra.mxu0 %v110
    %376 = vmatprep.subr.mxu0 0.0
    %377 = vmatpush1.msra.mxu0 %v109
    %378 = vmatprep.subr.mxu0 0.0
    %379 = vmatpush1.msra.mxu0 %v108
    %380 = vmatprep.subr.mxu0 0.0
    %381 = vmatpush1.msra.mxu0 %v107
    %382 = vmatprep.subr.mxu0 0.0
    %383 = vmatpush1.msra.mxu0 %v106
    %384 = vmatprep.subr.mxu0 0.0
    %385 = vmatpush1.msra.mxu0 %v105
    %386 = vmatprep.subr.mxu0 0.0
    %387 = vmatpush1.msra.mxu0 %v104
    %388 = vmatprep.subr.mxu0 0.0
    %389 = vmatpush1.msra.mxu0 %v103
    %390 = vmatprep.subr.mxu0 0.0
    %391 = vmatpush2.msra.mxu0 %v134
    %392 = vmatprep.subr.mxu0 0.0
    %393 = vmatpush2.msra.mxu0 %v133
    %394 = vmatprep.subr.mxu0 0.0
    %395 = vmatpush2.msra.mxu0 %v132
    %396 = vmatprep.subr.mxu0 0.0
    %397 = vmatpush2.msra.mxu0 %v131
    %398 = vmatprep.subr.mxu0 0.0
    %399 = vmatpush2.msra.mxu0 %v130
    %400 = vmatprep.subr.mxu0 0.0
    %401 = vmatpush2.msra.mxu0 %v129
    %402 = vmatprep.subr.mxu0 0.0
    %403 = vmatpush2.msra.mxu0 %v128
    %404 = vmatprep.subr.mxu0 0.0
    %405 = vmatpush2.msra.mxu0 %v127
    %406 = vmatprep.subr.mxu0 0.0
    %407 = vmatpush2.msra.mxu0 %v126
    %408 = vmatprep.subr.mxu0 0.0
    %409 = vmatpush2.msra.mxu0 %v125
    %410 = vmatprep.subr.mxu0 0.0
    %411 = vmatpush2.msra.mxu0 %v124
    %412 = vmatprep.subr.mxu0 0.0
    %413 = vmatpush2.msra.mxu0 %v123
    %414 = vmatprep.subr.mxu0 0.0
    %415 = vmatpush2.msra.mxu0 %v122
    %416 = vmatprep.subr.mxu0 0.0
    %417 = vmatpush2.msra.mxu0 %v121
    %418 = vmatprep.subr.mxu0 0.0
    %419 = vmatpush2.msra.mxu0 %v120
    %420 = vmatprep.subr.mxu0 0.0
    %421 = vmatpush2.msra.mxu0 %v119
    %422 = vmatprep.mubr.f32.mxu0 %v208
    %423 = vmatmul.mubr.f32.gmra.mxu0 %v200
    %v424 = vpop.f32.mrf.mxu0
    %v425 = vadd.f32 %v355, %v424
    %v426 = vpop.f32.mrf.mxu0
    %427 = vdwg.mxu0
    %428 = vmatprep.subr.mxu0 0.0
    %429 = vmatpush1.msra.mxu0 %v150
    %430 = vmatprep.subr.mxu0 0.0
    %431 = vmatpush1.msra.mxu0 %v149
    %432 = vmatprep.subr.mxu0 0.0
    %433 = vmatpush1.msra.mxu0 %v148
    %434 = vmatprep.subr.mxu0 0.0
    %435 = vmatpush1.msra.mxu0 %v147
    %436 = vmatprep.subr.mxu0 0.0
    %437 = vmatpush1.msra.mxu0 %v146
    %438 = vmatprep.subr.mxu0 0.0
    %439 = vmatpush1.msra.mxu0 %v145
    %440 = vmatprep.subr.mxu0 0.0
    %441 = vmatpush1.msra.mxu0 %v144
    %442 = vmatprep.subr.mxu0 0.0
    %443 = vmatpush1.msra.mxu0 %v143
    %444 = vmatprep.subr.mxu0 0.0
    %445 = vmatpush1.msra.mxu0 %v142
    %446 = vmatprep.subr.mxu0 0.0
    %447 = vmatpush1.msra.mxu0 %v141
    %448 = vmatprep.subr.mxu0 0.0
    %449 = vmatpush1.msra.mxu0 %v140
    %450 = vmatprep.subr.mxu0 0.0
    %451 = vmatpush1.msra.mxu0 %v139
    %452 = vmatprep.subr.mxu0 0.0
    %453 = vmatpush1.msra.mxu0 %v138
    %454 = vmatprep.subr.mxu0 0.0
    %455 = vmatpush1.msra.mxu0 %v137
    %456 = vmatprep.subr.mxu0 0.0
    %457 = vmatpush1.msra.mxu0 %v136
    %458 = vmatprep.subr.mxu0 0.0
    %459 = vmatpush1.msra.mxu0 %v135
    %460 = vmatprep.subr.mxu0 0.0
    %461 = vmatpush2.msra.mxu0 %v166
    %462 = vmatprep.subr.mxu0 0.0
    %463 = vmatpush2.msra.mxu0 %v165
    %464 = vmatprep.subr.mxu0 0.0
    %465 = vmatpush2.msra.mxu0 %v164
    %466 = vmatprep.subr.mxu0 0.0
    %467 = vmatpush2.msra.mxu0 %v163
    %468 = vmatprep.subr.mxu0 0.0
    %469 = vmatpush2.msra.mxu0 %v162
    %470 = vmatprep.subr.mxu0 0.0
    %471 = vmatpush2.msra.mxu0 %v161
    %472 = vmatprep.subr.mxu0 0.0
    %473 = vmatpush2.msra.mxu0 %v160
    %474 = vmatprep.subr.mxu0 0.0
    %475 = vmatpush2.msra.mxu0 %v159
    %476 = vmatprep.subr.mxu0 0.0
    %477 = vmatpush2.msra.mxu0 %v158
    %478 = vmatprep.subr.mxu0 0.0
    %479 = vmatpush2.msra.mxu0 %v157
    %480 = vmatprep.subr.mxu0 0.0
    %481 = vmatpush2.msra.mxu0 %v156
    %482 = vmatprep.subr.mxu0 0.0
    %483 = vmatpush2.msra.mxu0 %v155
    %484 = vmatprep.subr.mxu0 0.0
    %485 = vmatpush2.msra.mxu0 %v154
    %486 = vmatprep.subr.mxu0 0.0
    %487 = vmatpush2.msra.mxu0 %v153
    %488 = vmatprep.subr.mxu0 0.0
    %489 = vmatpush2.msra.mxu0 %v152
    %490 = vmatprep.subr.mxu0 0.0
    %491 = vmatpush2.msra.mxu0 %v151
    %492 = vmatprep.mubr.f32.mxu0 %v209
    %493 = vmatmul.mubr.f32.gmra.mxu0 %v207
    %v494 = vpop.f32.mrf.mxu0
    %v495 = vadd.f32 %v425, %v494
    %v496 = vpop.f32.mrf.mxu0
    %497 = vdwg.mxu0
    %498 = vst [vmem:[#allocation4] sm:$0x3] %v495
    // Predicated region
    $region14: #{linear_evaluator_forward.1} parent=1 // pred_check
      _
    $region15: #{linear_evaluator_forward.1} parent=1 // pred_check_branch
      %500 = sbr.rel (0) target = $region17
    $region16: #{linear_evaluator_forward.1} parent=1 // pred_region
      %s502 = ssub.s32 32, 32
      %503 = vsyncadd [#allocation5], %s502
      %s505 = sshll.u32 [#allocation4], 4
      %s506 = int_to_ptr.vmem [resolvable:$true] %s505
      %508 = dma.vmem_to_hbm [thread:$0]  %s506, 32, %s4, [#allocation5]
    $region17: #{linear_evaluator_forward.1} parent=1 // pred_fallthru
      _
    // Predicated region
    $region18: #{linear_evaluator_forward.1} parent=1 // pred_check
      _
    $region19: #{linear_evaluator_forward.1} parent=1 // pred_check_branch
      %510 = sbr.rel (0) target = $region21
    $region20: #{linear_evaluator_forward.1} parent=1 // pred_region
      %511 = dma.done [#allocation5], 32
    $region21: #{linear_evaluator_forward.1} parent=1 // pred_fallthru
      _
    %512 = vsyncpa [#allocation5], 1

</llo_original>
